<compile_context>
chip_gen: v7x
topology: tpu7x:2x2x1
jax: 0.10.0
libtpu: 0.0.40
codegen_flags: <defaults>
</compile_context>

<pallas_src>
import functools

import jax
import jax.numpy as jnp
from jax.experimental import pallas as pl
from jax.experimental.pallas import tpu as pltpu

LN_EPS = 1e-5  # torch.nn.LayerNorm default
HIGH = jax.lax.Precision.HIGHEST


# -----------------------------------------------------------------------------
# Pallas kernel: fused LayerNorm(4C) + Linear(4C -> 2C, no bias)
# -----------------------------------------------------------------------------
def _merge_ln_reduce_kernel(x_ref, g_ref, b_ref, w_ref, o_ref):
    x = x_ref[...]                                              # (tile_m, 4C), f32
    mean = jnp.mean(x, axis=-1, keepdims=True)
    var = jnp.mean((x - mean) ** 2, axis=-1, keepdims=True)
    y = (x - mean) * jax.lax.rsqrt(var + LN_EPS)
    y = y * g_ref[...] + b_ref[...]                             # affine LN
    o_ref[...] = jnp.dot(y, w_ref[...],
                         preferred_element_type=jnp.float32).astype(o_ref.dtype)


def _fused_norm_reduce(x2d, gamma, beta, w_red_t, *, tile_m=256):
    """x2d: (M, 4C) -> (M, 2C), LayerNorm over last dim then x @ w_red_t."""
    M, C4 = x2d.shape
    C2 = w_red_t.shape[1]

    # Pick a row tile: multiple of 8, no bigger than needed.
    tm = min(tile_m, M)
    tm = max(8, (tm // 8) * 8)
    # Pad M up to a multiple of the tile so the grid covers everything.
    M_pad = ((M + tm - 1) // tm) * tm
    if M_pad != M:
        x2d = jnp.pad(x2d, ((0, M_pad - M), (0, 0)))
    grid = (M_pad // tm,)

    out = pl.pallas_call(
        _merge_ln_reduce_kernel,
        grid=grid,
        out_shape=jax.ShapeDtypeStruct((M_pad, C2), x2d.dtype),
        in_specs=[
            pl.BlockSpec((tm, C4), lambda i: (i, 0)),     # activation tile (pipelined)
            pl.BlockSpec((1, C4), lambda i: (0, 0)),      # gamma (VMEM-resident)
            pl.BlockSpec((1, C4), lambda i: (0, 0)),      # beta  (VMEM-resident)
            pl.BlockSpec((C4, C2), lambda i: (0, 0)),     # reduction weight (resident)
        ],
        out_specs=pl.BlockSpec((tm, C2), lambda i: (i, 0)),
        compiler_params=pltpu.CompilerParams(
            dimension_semantics=("parallel",),            # shard rows across TCs on v7x
        ),
    )(x2d, gamma.reshape(1, C4), beta.reshape(1, C4), w_red_t)

    return out[:M]


# -----------------------------------------------------------------------------
# PatchMerging forward
# -----------------------------------------------------------------------------
def _pixel_unshuffle_concat(x, H, W):
    """Exactly mirrors the torch slicing + concat order: [x0, x1, x2, x3]."""
    B, L, C = x.shape
    assert L == H * W, "input feature has wrong size"
    assert H % 2 == 0 and W % 2 == 0, f"x size ({H}*{W}) are not even."
    xr = x.reshape(B, H, W, C)
    x0 = xr[:, 0::2, 0::2, :]     # (B, H/2, W/2, C)
    x1 = xr[:, 1::2, 0::2, :]
    x2 = xr[:, 0::2, 1::2, :]
    x3 = xr[:, 1::2, 1::2, :]
    xc = jnp.concatenate([x0, x1, x2, x3], axis=-1)     # (B, H/2, W/2, 4C)
    return xc.reshape(B, (H // 2) * (W // 2), 4 * C)


def patch_merging_forward(x, params, *, input_resolution, tile_m=256):
    """x: (B, H*W, C) -> (B, H*W/4, 2C)  (PatchMerging.forward)."""
    H, W = input_resolution
    B, L, C = x.shape
    xc = _pixel_unshuffle_concat(x, H, W)               # (B, L/4, 4C)
    M = B * (L // 4)
    y = _fused_norm_reduce(xc.reshape(M, 4 * C),
                           params["gamma"], params["beta"], params["w_red_t"],
                           tile_m=tile_m)
    return y.reshape(B, L // 4, 2 * C)


# -----------------------------------------------------------------------------
# Pure-JAX reference (numerical self-check)
# -----------------------------------------------------------------------------
def patch_merging_reference(x, params, *, input_resolution):
    H, W = input_resolution
    B, L, C = x.shape
    xc = _pixel_unshuffle_concat(x, H, W)               # (B, L/4, 4C)
    mean = jnp.mean(xc, -1, keepdims=True)
    var = jnp.mean((xc - mean) ** 2, -1, keepdims=True)
    y = (xc - mean) / jnp.sqrt(var + LN_EPS) * params["gamma"] + params["beta"]
    return jnp.einsum("blk,kd->bld", y, params["w_red_t"], precision=HIGH)


# -----------------------------------------------------------------------------
# Deterministic synthetic parameters
# -----------------------------------------------------------------------------
def init_patch_merging_params(key, dim):
    k0, k1, k2 = jax.random.split(key, 3)
    # torch: reduction = nn.Linear(4*dim, 2*dim, bias=False); weight shape (2C, 4C).
    # We store its transpose (4C, 2C) so the kernel does x @ w_red_t directly.
    return dict(
        gamma=1.0 + 0.02 * jax.random.normal(k0, (4 * dim,), jnp.float32),
        beta=0.02 * jax.random.normal(k1, (4 * dim,), jnp.float32),
        w_red_t=0.1 * jax.random.normal(k2, (4 * dim, 2 * dim), jnp.float32),
    )


# -----------------------------------------------------------------------------
if __name__ == "__main__":
    B, H, W, C = 2, 16, 16, 32          # x: (B, H*W, C) = (2, 256, 32); 4C = 128 (lane-dense)
    key = jax.random.PRNGKey(0)
    kx, kp = jax.random.split(key)
    x = jax.random.normal(kx, (B, H * W, C), jnp.float32)
    params = init_patch_merging_params(kp, C)

    fwd = jax.jit(functools.partial(patch_merging_forward,
                                    input_resolution=(H, W), tile_m=64))
    out = jax.block_until_ready(fwd(x, params))
    assert out.shape == (B, H * W // 4, 2 * C), out.shape

    ref = jax.block_until_ready(
        patch_merging_reference(x, params, input_resolution=(H, W)))
    err = float(jnp.max(jnp.abs(out - ref)))
    if err > 2e-4:
        raise AssertionError(f"Pallas result mismatch vs JAX reference: max abs err = {err}")

    print("KERNEL_OK")
</pallas_src>

<mosaic_0001>
module attributes {stable_mosaic.version = 11 : i64} {
  func.func @_merge_ln_reduce_kernel(%arg0: i32, %arg1: memref<64x128xf32, #tpu.memory_space<vmem>>, %arg2: memref<1x128xf32, #tpu.memory_space<vmem>>, %arg3: memref<1x128xf32, #tpu.memory_space<vmem>>, %arg4: memref<128x64xf32, #tpu.memory_space<vmem>>, %arg5: memref<64x64xf32, #tpu.memory_space<vmem>>) attributes {dimension_semantics = [#tpu.dimension_semantics<parallel>], iteration_bounds = array<i64: 2>, scalar_prefetch = 0 : i64, scratch_operands = 0 : i64, tpu.core_type = #tpu.core_type<tc>, window_params = [{transform_indices = @transform_0, window_bounds = array<i64: 64, 128>}, {pipeline_mode = #tpu.pipeline_mode<synchronous>, transform_indices = @transform_1, window_bounds = array<i64: 1, 128>}, {pipeline_mode = #tpu.pipeline_mode<synchronous>, transform_indices = @transform_2, window_bounds = array<i64: 1, 128>}, {pipeline_mode = #tpu.pipeline_mode<synchronous>, transform_indices = @transform_3, window_bounds = array<i64: 128, 64>}, {transform_indices = @transform_4, window_bounds = array<i64: 64, 64>}]} {
    %c0 = arith.constant 0 : index
    %c0_0 = arith.constant 0 : index
    %0 = vector.load %arg1[%c0, %c0_0] : memref<64x128xf32, #tpu.memory_space<vmem>>, vector<64x128xf32>
    %cst = arith.constant dense<0.000000e+00> : vector<64xf32>
    %1 = vector.multi_reduction <add>, %0, %cst [1] : vector<64x128xf32> to vector<64xf32>
    %2 = vector.shape_cast %1 : vector<64xf32> to vector<64x1xf32>
    %cst_1 = arith.constant 1.280000e+02 : f32
    %3 = vector.broadcast %cst_1 : f32 to vector<64x1xf32>
    %4 = arith.divf %2, %3 : vector<64x1xf32>
    %5 = vector.broadcast %4 : vector<64x1xf32> to vector<64x128xf32>
    %6 = arith.subf %0, %5 : vector<64x128xf32>
    %7 = arith.mulf %6, %6 : vector<64x128xf32>
    %cst_2 = arith.constant dense<0.000000e+00> : vector<64xf32>
    %8 = vector.multi_reduction <add>, %7, %cst_2 [1] : vector<64x128xf32> to vector<64xf32>
    %9 = vector.shape_cast %8 : vector<64xf32> to vector<64x1xf32>
    %cst_3 = arith.constant 1.280000e+02 : f32
    %10 = vector.broadcast %cst_3 : f32 to vector<64x1xf32>
    %11 = arith.divf %9, %10 : vector<64x1xf32>
    %12 = vector.broadcast %4 : vector<64x1xf32> to vector<64x128xf32>
    %13 = arith.subf %0, %12 : vector<64x128xf32>
    %cst_4 = arith.constant 9.99999974E-6 : f32
    %14 = vector.broadcast %cst_4 : f32 to vector<64x1xf32>
    %15 = arith.addf %11, %14 : vector<64x1xf32>
    %16 = math.rsqrt %15 : vector<64x1xf32>
    %17 = vector.broadcast %16 : vector<64x1xf32> to vector<64x128xf32>
    %18 = arith.mulf %13, %17 : vector<64x128xf32>
    %c0_5 = arith.constant 0 : index
    %c0_6 = arith.constant 0 : index
    %19 = vector.load %arg2[%c0_5, %c0_6] : memref<1x128xf32, #tpu.memory_space<vmem>>, vector<1x128xf32>
    %20 = vector.broadcast %19 : vector<1x128xf32> to vector<64x128xf32>
    %21 = arith.mulf %18, %20 : vector<64x128xf32>
    %c0_7 = arith.constant 0 : index
    %c0_8 = arith.constant 0 : index
    %22 = vector.load %arg3[%c0_7, %c0_8] : memref<1x128xf32, #tpu.memory_space<vmem>>, vector<1x128xf32>
    %23 = vector.broadcast %22 : vector<1x128xf32> to vector<64x128xf32>
    %24 = arith.addf %21, %23 : vector<64x128xf32>
    %c0_9 = arith.constant 0 : index
    %c0_10 = arith.constant 0 : index
    %25 = vector.load %arg4[%c0_9, %c0_10] : memref<128x64xf32, #tpu.memory_space<vmem>>, vector<128x64xf32>
    %cst_11 = arith.constant dense<0.000000e+00> : vector<64x64xf32>
    %26 = tpu.matmul %24, %25, %cst_11 {dimension_numbers = #tpu.dot_dimension_numbers<[1], [0], [0], [1], [0, 0, 1, 1], [], []>} : vector<64x128xf32>, vector<128x64xf32>, vector<64x64xf32> -> vector<64x64xf32>
    %c0_12 = arith.constant 0 : index
    %c0_13 = arith.constant 0 : index
    %27 = vector.load %arg5[%c0_12, %c0_13] : memref<64x64xf32, #tpu.memory_space<vmem>>, vector<64x64xf32>
    tpu.vector_store %arg5[%c0_12, %c0_13], %26 {strides = array<i32>} : memref<64x64xf32, #tpu.memory_space<vmem>>, vector<64x64xf32>,
    return
  }
  func.func @transform_0(%arg0: i32) -> (i32, i32) {
    %c0_i32 = arith.constant 0 : i32
    %c0_i32_0 = arith.constant 0 : i32
    return %arg0, %c0_i32 : i32, i32
  }
  func.func @transform_1(%arg0: i32) -> (i32, i32) {
    %c0_i32 = arith.constant 0 : i32
    %c0_i32_0 = arith.constant 0 : i32
    %c0_i32_1 = arith.constant 0 : i32
    return %c0_i32, %c0_i32_0 : i32, i32
  }
  func.func @transform_2(%arg0: i32) -> (i32, i32) {
    %c0_i32 = arith.constant 0 : i32
    %c0_i32_0 = arith.constant 0 : i32
    %c0_i32_1 = arith.constant 0 : i32
    return %c0_i32, %c0_i32_0 : i32, i32
  }
  func.func @transform_3(%arg0: i32) -> (i32, i32) {
    %c0_i32 = arith.constant 0 : i32
    %c0_i32_0 = arith.constant 0 : i32
    %c0_i32_1 = arith.constant 0 : i32
    return %c0_i32, %c0_i32_0 : i32, i32
  }
  func.func @transform_4(%arg0: i32) -> (i32, i32) {
    %c0_i32 = arith.constant 0 : i32
    %c0_i32_0 = arith.constant 0 : i32
    return %arg0, %c0_i32 : i32, i32
  }
}

</mosaic_0001>

<llo_original>
// kernel: patch_merging_forward.1
$region0: #{patch_merging_forward.1}
  #allocation0 [shape = 'u32[]', space=smem, size = 0x4, offset = 0x4, fixed_abs, tag = 'smem constant byte address 0x4 - core index']
  #allocation1 [shape = 'u32[144,128]{1,0:T(1,128)}', space=vmem, size = 0x12000, scoped, tag = 'internal scratch']
  %s0 = inlined_call_operand.vmem [shape: f32[128,128], index: 0, kind: input, shape index: {}]
  %s1 = inlined_call_operand.vmem [shape: f32[1,128], index: 1, kind: input, shape index: {}]
  %s2 = inlined_call_operand.vmem [shape: f32[1,128], index: 2, kind: input, shape index: {}]
  %s3 = inlined_call_operand.vmem [shape: f32[128,64], index: 3, kind: input, shape index: {}]
  %s4 = inlined_call_operand.hbm [shape: f32[128,64], index: 4, kind: output, shape index: {}]
  %s5 = sld [smem:[#allocation0]]
  $region49: #{patch_merging_forward.1} parent=0
    _
  %s7 = ssub.s32 1, %s5
  %s8 = scalar_select 0, %s7, %s5
  $region1: #{patch_merging_forward.1} parent=0
    #allocation2 [shape = 'u8[65536]{0}', space=vmem, size = 0x10000, scoped, tag = 'output window, operand 0']
    #allocation3 [shape = 's32[2]{0}', space=sflag, size = 0x8, scoped, tag = 'scoped memory for patch_merging_forward.1']
    %9 = vsyncpa [#allocation3], 0
    %s10 = scalar_lea.sflag [#allocation3], 1
    %11 = vsyncpa %s10, 0
    loop: start=0, step=1, limit=4
    $region2: #{patch_merging_forward.1} parent=1 // loop_pre_header
      _
    $region3: #{patch_merging_forward.1} parent=1 // loop_header
      %s13 = sphi 0, %s17
      %p14 = scmp.ge.s32.totalorder %s13, 4
      %s23 = sphi 0, %s25
      %s26 = sphi 0, %s23
      %s27 = sphi 0, %s26
      %s43 = sphi 0, %s27
      %s47 = sphi 0, %s47
      %s49 = sphi 0, %s47
      %s50 = sphi 0, %s49
      %s64 = sphi 0, %s50
      %s68 = sphi 0, %s68
      %s70 = sphi 0, %s68
      %s71 = sphi 0, %s70
      %s85 = sphi 0, %s71
      %s89 = sphi 0, %s89
      %s91 = sphi 0, %s89
      %s92 = sphi 0, %s91
      %s106 = sphi 0, %s92
      %s112 = sphi 0, %s114
      %s115 = sphi 0, %s112
      %s116 = sphi 0, %s115
      %s132 = sphi 0, %s116
    $region4: #{patch_merging_forward.1} parent=1 // loop_header_branch
      %16 = sbr.rel (%p14) target = $region8
    $region5: #{patch_merging_forward.1} parent=1 // loop_body
      %s18 = ssub.s32 %s13, 1
      %s19 = ssub.s32 %s13, 2
      %s20 = sadd.s32 %s13, 1
      %s21 = ssub.s32 %s13, %s20
      %p22 = scmp.eq.s32.totalorder %s21, 0
      %s24 = sadd.s32 %s23, 1
      %s25 = scalar_select %p22, %s23, %s24
      %p28 = pneg %p22
      %p29 = scmp.eq.s32.totalorder %s13, 1
      %p30 = por %p28, %p29
      %p31 = scmp.ne.s32.totalorder %s23, %s26
      %p32 = scmp.eq.s32.totalorder %s13, 0
      %p33 = por %p31, %p32
      %p34 = scmp.ne.s32.totalorder %s23, %s26
      %p35 = scmp.eq.s32.totalorder %s18, 1
      %p36 = por %p34, %p35
      %p37 = scmp.ne.s32.totalorder %s26, %s27
      %p38 = scmp.eq.s32.totalorder %s18, 0
      %p39 = por %p37, %p38
      %p40 = scmp.ne.s32.totalorder %s26, %s27
      %p41 = scmp.eq.s32.totalorder %s19, 1
      %p42 = por %p40, %p41
      %p44 = scmp.ne.s32.totalorder %s27, %s43
      %p45 = scmp.eq.s32.totalorder %s19, 0
      %p46 = por %p44, %p45
      %s48 = sadd.s32 %s47, 1
      %p51 = scmp.eq.s32.totalorder %s13, 1
      %p52 = scmp.ne.s32.totalorder %s47, %s49
      %p53 = scmp.eq.s32.totalorder %s13, 0
      %p54 = por %p52, %p53
      %p55 = scmp.ne.s32.totalorder %s47, %s49
      %p56 = scmp.eq.s32.totalorder %s18, 1
      %p57 = por %p55, %p56
      %p58 = scmp.ne.s32.totalorder %s49, %s50
      %p59 = scmp.eq.s32.totalorder %s18, 0
      %p60 = por %p58, %p59
      %p61 = scmp.ne.s32.totalorder %s49, %s50
      %p62 = scmp.eq.s32.totalorder %s19, 1
      %p63 = por %p61, %p62
      %p65 = scmp.ne.s32.totalorder %s50, %s64
      %p66 = scmp.eq.s32.totalorder %s19, 0
      %p67 = por %p65, %p66
      %s69 = sadd.s32 %s68, 1
      %p72 = scmp.eq.s32.totalorder %s13, 1
      %p73 = scmp.ne.s32.totalorder %s68, %s70
      %p74 = scmp.eq.s32.totalorder %s13, 0
      %p75 = por %p73, %p74
      %p76 = scmp.ne.s32.totalorder %s68, %s70
      %p77 = scmp.eq.s32.totalorder %s18, 1
      %p78 = por %p76, %p77
      %p79 = scmp.ne.s32.totalorder %s70, %s71
      %p80 = scmp.eq.s32.totalorder %s18, 0
      %p81 = por %p79, %p80
      %p82 = scmp.ne.s32.totalorder %s70, %s71
      %p83 = scmp.eq.s32.totalorder %s19, 1
      %p84 = por %p82, %p83
      %p86 = scmp.ne.s32.totalorder %s71, %s85
      %p87 = scmp.eq.s32.totalorder %s19, 0
      %p88 = por %p86, %p87
      %s90 = sadd.s32 %s89, 1
      %p93 = scmp.eq.s32.totalorder %s13, 1
      %p94 = scmp.ne.s32.totalorder %s89, %s91
      %p95 = scmp.eq.s32.totalorder %s13, 0
      %p96 = por %p94, %p95
      %p97 = scmp.ne.s32.totalorder %s89, %s91
      %p98 = scmp.eq.s32.totalorder %s18, 1
      %p99 = por %p97, %p98
      %p100 = scmp.ne.s32.totalorder %s91, %s92
      %p101 = scmp.eq.s32.totalorder %s18, 0
      %p102 = por %p100, %p101
      %p103 = scmp.ne.s32.totalorder %s91, %s92
      %p104 = scmp.eq.s32.totalorder %s19, 1
      %p105 = por %p103, %p104
      %p107 = scmp.ne.s32.totalorder %s92, %s106
      %p108 = scmp.eq.s32.totalorder %s19, 0
      %p109 = por %p107, %p108
      %s110 = ssub.s32 %s13, %s20
      %p111 = scmp.eq.s32.totalorder %s110, 0
      %s113 = sadd.s32 %s112, 1
      %s114 = scalar_select %p111, %s112, %s113
      %p117 = pneg %p111
      %p118 = scmp.eq.s32.totalorder %s13, 1
      %p119 = por %p117, %p118
      %p120 = scmp.ne.s32.totalorder %s112, %s115
      %p121 = scmp.eq.s32.totalorder %s13, 0
      %p122 = por %p120, %p121
      %p123 = scmp.ne.s32.totalorder %s112, %s115
      %p124 = scmp.eq.s32.totalorder %s18, 1
      %p125 = por %p123, %p124
      %p126 = scmp.ne.s32.totalorder %s115, %s116
      %p127 = scmp.eq.s32.totalorder %s18, 0
      %p128 = por %p126, %p127
      %p129 = scmp.ne.s32.totalorder %s115, %s116
      %p130 = scmp.eq.s32.totalorder %s19, 1
      %p131 = por %p129, %p130
      %p133 = scmp.ne.s32.totalorder %s116, %s132
      %p134 = scmp.eq.s32.totalorder %s19, 0
      %p135 = por %p133, %p134
      %p136 = scmp.le.s32.totalorder 1, %s13
      %p137 = scmp.lt.s32.totalorder %s13, 3
      %p138 = pnand %p136, %p137
      %p139 = pneg %p138
      // Predicated region
      $region9: #{patch_merging_forward.1} parent=5 // pred_check
        _
      $region10: #{patch_merging_forward.1} parent=5 // pred_check_branch
        %141 = sbr.rel (%p138) target = $region12
      $region11: #{patch_merging_forward.1} parent=5 // pred_region
        %s142 = ssub.s32 %s13, 1
        // Predicated region
        $region13: #{patch_merging_forward.1} parent=11 // pred_check
          %p143 = pneg %p60
        $region14: #{patch_merging_forward.1} parent=11 // pred_check_branch
          %145 = sbr.rel (%p143) target = $region16
        $region15: #{patch_merging_forward.1} parent=11 // pred_region
          _
        $region16: #{patch_merging_forward.1} parent=11 // pred_fallthru
          _
        // Predicated region
        $region17: #{patch_merging_forward.1} parent=11 // pred_check
          %p146 = pneg %p81
        $region18: #{patch_merging_forward.1} parent=11 // pred_check_branch
          %148 = sbr.rel (%p146) target = $region20
        $region19: #{patch_merging_forward.1} parent=11 // pred_region
          _
        $region20: #{patch_merging_forward.1} parent=11 // pred_fallthru
          _
        // Predicated region
        $region21: #{patch_merging_forward.1} parent=11 // pred_check
          %p149 = pneg %p102
        $region22: #{patch_merging_forward.1} parent=11 // pred_check_branch
          %151 = sbr.rel (%p149) target = $region24
        $region23: #{patch_merging_forward.1} parent=11 // pred_region
          _
        $region24: #{patch_merging_forward.1} parent=11 // pred_fallthru
          _
      $region12: #{patch_merging_forward.1} parent=5 // pred_fallthru
        _
      %p152 = scmp.lt.s32.totalorder %s13, 2
      // Predicated region
      $region25: #{patch_merging_forward.1} parent=5 // pred_check
        %p153 = pneg %p152
      $region26: #{patch_merging_forward.1} parent=5 // pred_check_branch
        %155 = sbr.rel (%p153) target = $region28
      $region27: #{patch_merging_forward.1} parent=5 // pred_region
        // Predicated region
        $region29: #{patch_merging_forward.1} parent=27 // pred_check
          %p156 = pneg %p33
        $region30: #{patch_merging_forward.1} parent=27 // pred_check_branch
          %158 = sbr.rel (%p156) target = $region32
        $region31: #{patch_merging_forward.1} parent=27 // pred_region
          %s159 = smul.u32 8, %s13
          %p160 = scmp.lt.s32.totalorder %s159, 15
          %s161 = scalar_select %p160, %s159, 15
          %s162 = smul.addr %s161, 8
          %s163 = scalar_lea.vmem %s0, %s162
          %s164 = smul.u32 8, %s13
        $region32: #{patch_merging_forward.1} parent=27 // pred_fallthru
          _
      $region28: #{patch_merging_forward.1} parent=5 // pred_fallthru
        _
      %p165 = scmp.le.s32.totalorder 1, %s13
      %p166 = scmp.lt.s32.totalorder %s13, 3
      %p167 = pnand %p165, %p166
      %p168 = pneg %p167
      // Predicated region
      $region33: #{patch_merging_forward.1} parent=5 // pred_check
        _
      $region34: #{patch_merging_forward.1} parent=5 // pred_check_branch
        %170 = sbr.rel (%p167) target = $region36
      $region35: #{patch_merging_forward.1} parent=5 // pred_region
        %s171 = ssub.s32 %s13, 1
        %s172 = smul.u32 8, %s18
        %p173 = scmp.lt.s32.totalorder %s172, 15
        %s174 = scalar_select %p173, %s172, 15
        %s175 = smul.addr %s174, 8
        %s176 = scalar_lea.vmem %s0, %s175
        %p177 = pneg %p39
        %p178 = pneg %p36
        %p179 = pneg %p60
        %p180 = pneg %p57
        %p181 = pneg %p81
        %p182 = pneg %p78
        %p183 = pneg %p102
        %p184 = pneg %p99
        %p185 = pneg %p128
        %p186 = pneg %p125
        %s187 = sand.u32 %s115, 1
        %s188 = scalar_lea.sflag [#allocation3], %s187
        %s189 = sand.u32 %s115, 1
        %s190 = smul.addr %s189, 64
        %s191 = scalar_lea.vmem [#allocation2], %s190
        %s192 = smul.u32 8, %s18
        %p193 = scmp.lt.s32.totalorder %s192, 15
        %s194 = scalar_select %p193, %s192, 15
        %s195 = smul.addr %s194, 8
        %s196 = scalar_lea.vmem %s0, %s195
        %s197 = smul.u32 8, %s18
        %s198 = smul.u32 8, %s18
        %v199 = vld [vmem:[%s196] sm:$0xff]
        %v200 = vld [vmem:[%s196 + $0x8] sm:$0xff]
        %v201 = vld [vmem:[%s196 + $0x10] sm:$0xff]
        %v202 = vld [vmem:[%s196 + $0x18] sm:$0xff]
        %v203 = vld [vmem:[%s196 + $0x20] sm:$0xff]
        %v204 = vld [vmem:[%s196 + $0x28] sm:$0xff]
        %v205 = vld [vmem:[%s196 + $0x30] sm:$0xff]
        %v206 = vld [vmem:[%s196 + $0x38] sm:$0xff]
        %207 = vadd.xlane.f32.xlu0 %v199
        %v208 = vpop.xlane.xlu0 %207
        %209 = vadd.xlane.f32.xlu0 %v200
        %v210 = vpop.xlane.xlu0 %209
        %211 = vadd.xlane.f32.xlu0 %v201
        %v212 = vpop.xlane.xlu0 %211
        %213 = vadd.xlane.f32.xlu0 %v202
        %v214 = vpop.xlane.xlu0 %213
        %215 = vadd.xlane.f32.xlu0 %v203
        %v216 = vpop.xlane.xlu0 %215
        %217 = vadd.xlane.f32.xlu0 %v204
        %v218 = vpop.xlane.xlu0 %217
        %219 = vadd.xlane.f32.xlu0 %v205
        %v220 = vpop.xlane.xlu0 %219
        %221 = vadd.xlane.f32.xlu0 %v206
        %v222 = vpop.xlane.xlu0 %221
        %v223 = vrcp.pop 128.0
        %v224 = vmul.f32 %v208, %v223
        %v225 = vmul.f32 %v210, %v223
        %v226 = vmul.f32 %v212, %v223
        %v227 = vmul.f32 %v214, %v223
        %v228 = vmul.f32 %v216, %v223
        %v229 = vmul.f32 %v218, %v223
        %v230 = vmul.f32 %v220, %v223
        %v231 = vmul.f32 %v222, %v223
        %v232 = vsub.f32 %v199, %v224
        %v233 = vsub.f32 %v200, %v225
        %v234 = vsub.f32 %v201, %v226
        %v235 = vsub.f32 %v202, %v227
        %v236 = vsub.f32 %v203, %v228
        %v237 = vsub.f32 %v204, %v229
        %v238 = vsub.f32 %v205, %v230
        %v239 = vsub.f32 %v206, %v231
        %v240 = vmul.f32 %v232, %v232
        %v241 = vmul.f32 %v233, %v233
        %v242 = vmul.f32 %v234, %v234
        %v243 = vmul.f32 %v235, %v235
        %v244 = vmul.f32 %v236, %v236
        %v245 = vmul.f32 %v237, %v237
        %v246 = vmul.f32 %v238, %v238
        %v247 = vmul.f32 %v239, %v239
        %248 = vadd.xlane.f32.xlu0 %v240
        %v249 = vpop.xlane.xlu0 %248
        %250 = vadd.xlane.f32.xlu0 %v241
        %v251 = vpop.xlane.xlu0 %250
        %252 = vadd.xlane.f32.xlu0 %v242
        %v253 = vpop.xlane.xlu0 %252
        %254 = vadd.xlane.f32.xlu0 %v243
        %v255 = vpop.xlane.xlu0 %254
        %256 = vadd.xlane.f32.xlu0 %v244
        %v257 = vpop.xlane.xlu0 %256
        %258 = vadd.xlane.f32.xlu0 %v245
        %v259 = vpop.xlane.xlu0 %258
        %260 = vadd.xlane.f32.xlu0 %v246
        %v261 = vpop.xlane.xlu0 %260
        %262 = vadd.xlane.f32.xlu0 %v247
        %v263 = vpop.xlane.xlu0 %262
        %v264 = vmul.f32 %v249, %v223
        %v265 = vmul.f32 %v251, %v223
        %v266 = vmul.f32 %v253, %v223
        %v267 = vmul.f32 %v255, %v223
        %v268 = vmul.f32 %v257, %v223
        %v269 = vmul.f32 %v259, %v223
        %v270 = vmul.f32 %v261, %v223
        %v271 = vmul.f32 %v263, %v223
        %v272 = vadd.f32 %v264, 1e-05
        %v273 = vadd.f32 %v265, 1e-05
        %v274 = vadd.f32 %v266, 1e-05
        %v275 = vadd.f32 %v267, 1e-05
        %v276 = vadd.f32 %v268, 1e-05
        %v277 = vadd.f32 %v269, 1e-05
        %v278 = vadd.f32 %v270, 1e-05
        %v279 = vadd.f32 %v271, 1e-05
        %v280 = vrsqrt.pop %v272
        %v281 = vrsqrt.pop %v273
        %v282 = vrsqrt.pop %v274
        %v283 = vrsqrt.pop %v275
        %v284 = vrsqrt.pop %v276
        %v285 = vrsqrt.pop %v277
        %v286 = vrsqrt.pop %v278
        %v287 = vrsqrt.pop %v279
        %v288 = vmul.f32 %v232, %v280
        %v289 = vmul.f32 %v233, %v281
        %v290 = vmul.f32 %v234, %v282
        %v291 = vmul.f32 %v235, %v283
        %v292 = vmul.f32 %v236, %v284
        %v293 = vmul.f32 %v237, %v285
        %v294 = vmul.f32 %v238, %v286
        %v295 = vmul.f32 %v239, %v287
        %v296 = vld [vmem:[%s1] sm:$0x1]
        %v298 = vlaneseq
        %v299 = vshrl.u32 %v298, 7
        %v300 = vsub.s32 0, %v299
        %v301 = vrot.slane %v296, %v300
        %v303 = vmul.f32 %v288, %v301
        %v304 = vmul.f32 %v289, %v301
        %v305 = vmul.f32 %v290, %v301
        %v306 = vmul.f32 %v291, %v301
        %v307 = vmul.f32 %v292, %v301
        %v308 = vmul.f32 %v293, %v301
        %v309 = vmul.f32 %v294, %v301
        %v310 = vmul.f32 %v295, %v301
        %v311 = vld [vmem:[%s2] sm:$0x1]
        %v313 = vlaneseq
        %v314 = vshrl.u32 %v313, 7
        %v315 = vsub.s32 0, %v314
        %v316 = vrot.slane %v311, %v315
        %v318 = vadd.f32 %v303, %v316
        %v319 = vadd.f32 %v304, %v316
        %v320 = vadd.f32 %v305, %v316
        %v321 = vadd.f32 %v306, %v316
        %v322 = vadd.f32 %v307, %v316
        %v323 = vadd.f32 %v308, %v316
        %v324 = vadd.f32 %v309, %v316
        %v325 = vadd.f32 %v310, %v316
        %v326 = vld [vmem:[%s3] sm:$0xff]
        %v327 = vld [vmem:[%s3 + $0x8] sm:$0xff]
        %v328 = vld [vmem:[%s3 + $0x10] sm:$0xff]
        %v329 = vld [vmem:[%s3 + $0x18] sm:$0xff]
        %v330 = vld [vmem:[%s3 + $0x20] sm:$0xff]
        %v331 = vld [vmem:[%s3 + $0x28] sm:$0xff]
        %v332 = vld [vmem:[%s3 + $0x30] sm:$0xff]
        %v333 = vld [vmem:[%s3 + $0x38] sm:$0xff]
        %v334 = vld [vmem:[%s3 + $0x40] sm:$0xff]
        %v335 = vld [vmem:[%s3 + $0x48] sm:$0xff]
        %v336 = vld [vmem:[%s3 + $0x50] sm:$0xff]
        %v337 = vld [vmem:[%s3 + $0x58] sm:$0xff]
        %v338 = vld [vmem:[%s3 + $0x60] sm:$0xff]
        %v339 = vld [vmem:[%s3 + $0x68] sm:$0xff]
        %v340 = vld [vmem:[%s3 + $0x70] sm:$0xff]
        %v341 = vld [vmem:[%s3 + $0x78] sm:$0xff]
        %342 = vmatprep.subr.mxu0 0.0
        %343 = vmatpush1.msra.mxu0 %v326
        %344 = vmatprep.subr.mxu0 0.0
        %345 = vmatpush1.msra.mxu0 %v327
        %346 = vmatprep.subr.mxu0 0.0
        %347 = vmatpush1.msra.mxu0 %v328
        %348 = vmatprep.subr.mxu0 0.0
        %349 = vmatpush1.msra.mxu0 %v329
        %350 = vmatprep.subr.mxu0 0.0
        %351 = vmatpush1.msra.mxu0 %v330
        %352 = vmatprep.subr.mxu0 0.0
        %353 = vmatpush1.msra.mxu0 %v331
        %354 = vmatprep.subr.mxu0 0.0
        %355 = vmatpush1.msra.mxu0 %v332
        %356 = vmatprep.subr.mxu0 0.0
        %357 = vmatpush1.msra.mxu0 %v333
        %358 = vmatprep.subr.mxu0 0.0
        %359 = vmatpush1.msra.mxu0 %v334
        %360 = vmatprep.subr.mxu0 0.0
        %361 = vmatpush1.msra.mxu0 %v335
        %362 = vmatprep.subr.mxu0 0.0
        %363 = vmatpush1.msra.mxu0 %v336
        %364 = vmatprep.subr.mxu0 0.0
        %365 = vmatpush1.msra.mxu0 %v337
        %366 = vmatprep.subr.mxu0 0.0
        %367 = vmatpush1.msra.mxu0 %v338
        %368 = vmatprep.subr.mxu0 0.0
        %369 = vmatpush1.msra.mxu0 %v339
        %370 = vmatprep.subr.mxu0 0.0
        %371 = vmatpush1.msra.mxu0 %v340
        %372 = vmatprep.subr.mxu0 0.0
        %373 = vmatpush1.msra.mxu0 %v341
        %374 = vmatprep.subr.mxu0 0.0
        %375 = vmatpush1.msra.mxu0 0.0
        %376 = vmatprep.subr.mxu0 0.0
        %377 = vmatpush1.msra.mxu0 0.0
        %378 = vmatprep.subr.mxu0 0.0
        %379 = vmatpush1.msra.mxu0 0.0
        %380 = vmatprep.subr.mxu0 0.0
        %381 = vmatpush1.msra.mxu0 0.0
        %382 = vmatprep.subr.mxu0 0.0
        %383 = vmatpush1.msra.mxu0 0.0
        %384 = vmatprep.subr.mxu0 0.0
        %385 = vmatpush1.msra.mxu0 0.0
        %386 = vmatprep.subr.mxu0 0.0
        %387 = vmatpush1.msra.mxu0 0.0
        %388 = vmatprep.subr.mxu0 0.0
        %389 = vmatpush1.msra.mxu0 0.0
        %390 = vmatprep.subr.mxu0 0.0
        %391 = vmatpush1.msra.mxu0 0.0
        %392 = vmatprep.subr.mxu0 0.0
        %393 = vmatpush1.msra.mxu0 0.0
        %394 = vmatprep.subr.mxu0 0.0
        %395 = vmatpush1.msra.mxu0 0.0
        %396 = vmatprep.subr.mxu0 0.0
        %397 = vmatpush1.msra.mxu0 0.0
        %398 = vmatprep.subr.mxu0 0.0
        %399 = vmatpush1.msra.mxu0 0.0
        %400 = vmatprep.subr.mxu0 0.0
        %401 = vmatpush1.msra.mxu0 0.0
        %402 = vmatprep.subr.mxu0 0.0
        %403 = vmatpush1.msra.mxu0 0.0
        %404 = vmatprep.subr.mxu0 0.0
        %405 = vmatpush1.msra.mxu0 0.0
        %406 = vmatprep.mubr.f32.mxu0 0.0
        %407 = vmatmul.mubr.f32.gmra.mrb[0].mxu0 %v318
        %v408 = vpop.f32.mrb[0].mxu0
        %v409 = vadd.f32 0.0, %v408
        %v410 = vpop.f32.mrb[0].mxu0
        %411 = vmatprep.mubr.f32.mxu0 0.0
        %412 = vmatmul.mubr.f32.gmra.mrb[0].mxu0 %v319
        %v413 = vpop.f32.mrb[0].mxu0
        %v414 = vadd.f32 0.0, %v413
        %v415 = vpop.f32.mrb[0].mxu0
        %416 = vmatprep.mubr.f32.mxu0 0.0
        %417 = vmatmul.mubr.f32.gmra.mrb[0].mxu0 %v320
        %v418 = vpop.f32.mrb[0].mxu0
        %v419 = vadd.f32 0.0, %v418
        %v420 = vpop.f32.mrb[0].mxu0
        %421 = vmatprep.mubr.f32.mxu0 0.0
        %422 = vmatmul.mubr.f32.gmra.mrb[0].mxu0 %v321
        %v423 = vpop.f32.mrb[0].mxu0
        %v424 = vadd.f32 0.0, %v423
        %v425 = vpop.f32.mrb[0].mxu0
        %426 = vmatprep.mubr.f32.mxu0 0.0
        %427 = vmatmul.mubr.f32.gmra.mrb[0].mxu0 %v322
        %v428 = vpop.f32.mrb[0].mxu0
        %v429 = vadd.f32 0.0, %v428
        %v430 = vpop.f32.mrb[0].mxu0
        %431 = vmatprep.mubr.f32.mxu0 0.0
        %432 = vmatmul.mubr.f32.gmra.mrb[0].mxu0 %v323
        %v433 = vpop.f32.mrb[0].mxu0
        %v434 = vadd.f32 0.0, %v433
        %v435 = vpop.f32.mrb[0].mxu0
        %436 = vmatprep.mubr.f32.mxu0 0.0
        %437 = vmatmul.mubr.f32.gmra.mrb[0].mxu0 %v324
        %v438 = vpop.f32.mrb[0].mxu0
        %v439 = vadd.f32 0.0, %v438
        %v440 = vpop.f32.mrb[0].mxu0
        %441 = vmatprep.mubr.f32.mxu0 0.0
        %442 = vmatmul.mubr.f32.gmra.mrb[0].mxu0 %v325
        %v443 = vpop.f32.mrb[0].mxu0
        %v444 = vadd.f32 0.0, %v443
        %v445 = vpop.f32.mrb[0].mxu0
        %446 = vdwg.mxu0
        %vm447 = vcmask 523264
        %448 = vst.msk [vmem:[%s191] sm:$0xff] %vm447, %v409
        %449 = vst.msk [vmem:[%s191 + $0x8] sm:$0xff] %vm447, %v414
        %450 = vst.msk [vmem:[%s191 + $0x10] sm:$0xff] %vm447, %v419
        %451 = vst.msk [vmem:[%s191 + $0x18] sm:$0xff] %vm447, %v424
        %452 = vst.msk [vmem:[%s191 + $0x20] sm:$0xff] %vm447, %v429
        %453 = vst.msk [vmem:[%s191 + $0x28] sm:$0xff] %vm447, %v434
        %454 = vst.msk [vmem:[%s191 + $0x30] sm:$0xff] %vm447, %v439
        %455 = vst.msk [vmem:[%s191 + $0x38] sm:$0xff] %vm447, %v444
        %s456 = sand.u32 %s115, 1
        %s457 = scalar_lea.sflag [#allocation3], %s456
        %s458 = sand.u32 %s115, 1
        %s459 = smul.addr %s458, 64
        %s460 = scalar_lea.vmem [#allocation2], %s459
        // Predicated region
        $region37: #{patch_merging_forward.1} parent=35 // pred_check
          %p461 = pneg %p125
        $region38: #{patch_merging_forward.1} parent=35 // pred_check_branch
          %463 = sbr.rel (%p461) target = $region40
        $region39: #{patch_merging_forward.1} parent=35 // pred_region
          %s464 = smul.u32 8, %s18
          %s466 = ssub.s32 1024, 1024
          %467 = vsyncadd %s457, %s466
          %s468 = smul.addr %s464, 128
          %s469 = scalar_lea.hbm %s4, %s468
          %s470 = sshll.u32 %s460, 4
          %s471 = int_to_ptr.vmem [resolvable:$true] %s470
          %476 = dma.vmem_to_hbm [thread:$0]  %s471, 1024, %s469, %s457, 128, 128, 8
        $region40: #{patch_merging_forward.1} parent=35 // pred_fallthru
          _
      $region36: #{patch_merging_forward.1} parent=5 // pred_fallthru
        _
      %p477 = scmp.le.s32.totalorder 2, %s13
      // Predicated region
      $region41: #{patch_merging_forward.1} parent=5 // pred_check
        %p478 = pneg %p477
      $region42: #{patch_merging_forward.1} parent=5 // pred_check_branch
        %480 = sbr.rel (%p478) target = $region44
      $region43: #{patch_merging_forward.1} parent=5 // pred_region
        %s481 = ssub.s32 %s13, 2
        // Predicated region
        $region45: #{patch_merging_forward.1} parent=43 // pred_check
          %p482 = pneg %p131
        $region46: #{patch_merging_forward.1} parent=43 // pred_check_branch
          %484 = sbr.rel (%p482) target = $region48
        $region47: #{patch_merging_forward.1} parent=43 // pred_region
          %s485 = sand.u32 %s116, 1
          %s486 = scalar_lea.sflag [#allocation3], %s485
          %s487 = sand.u32 %s116, 1
          %s488 = smul.addr %s487, 64
          %s489 = scalar_lea.vmem [#allocation2], %s488
          %490 = dma.done %s486, 1024
        $region48: #{patch_merging_forward.1} parent=43 // pred_fallthru
          _
      $region44: #{patch_merging_forward.1} parent=5 // pred_fallthru
        _
    $region6: #{patch_merging_forward.1} parent=1 // loop_footer
      %s17 = sadd.s32 1, %s13
    $region7: #{patch_merging_forward.1} parent=1 // loop_footer_branch
      %12 = sbr.rel target = $region3
    $region8: #{patch_merging_forward.1} parent=1 // loop_exit
      _
    %491 = vsyncpa [#allocation3], 1
    %s492 = scalar_lea.sflag [#allocation3], 1
    %493 = vsyncpa %s492, 1

</llo_original>
